<compile_context>
chip_gen: v5e
topology: v5e:2x2
jax: 0.10.0
libtpu: 0.0.40
codegen_flags: <defaults>
</compile_context>

<pallas_src>
import jax
import jax.numpy as jnp
from jax.experimental import pallas as pl
from jax.experimental.pallas import tpu as pltpu


def _make_kernel(block_rows, lanes, total_rows, ragged):
    def kernel(pred_ref, gt_ref, mask_ref, w_ref, neg_ref, part_ref):
        # Upcast right after load (bf16 storage is exact for 0/1 masks; all
        # compute stays f32 so v5e's lack of bf16 VPU/EUP paths is irrelevant).
        pred = pred_ref[...].astype(jnp.float32)
        gt = gt_ref[...].astype(jnp.float32)
        msk = mask_ref[...].astype(jnp.float32)
        w = w_ref[...].astype(jnp.float32)

        # (gt * mask).byte() / ((1 - gt) * mask).byte(): truncating cast; values
        # are non-negative so floor == trunc.
        positive = jnp.floor(gt * msk)
        negative = jnp.floor((1.0 - gt) * msk)

        # binary_cross_entropy(sigmoid(pred), gt) in logits (softplus) form:
        #   max(x, 0) - x*gt + log(1 + exp(-|x|))
        # Identical away from sigmoid saturation; drops the divide and the two
        # -100-clamped logs of the literal PyTorch formulation (exp + log only).
        loss = (jnp.maximum(pred, 0.0) - pred * gt
                + jnp.log(1.0 + jnp.exp(-jnp.abs(pred))))

        pos_loss = loss * positive * w
        neg_loss = loss * negative * w

        if ragged:
            # The last grid step reads past the true row count (undefined rows);
            # zero those rows out of both the stats and the writeback.
            row = (pl.program_id(0) * block_rows
                   + jax.lax.broadcasted_iota(jnp.int32, (block_rows, lanes), 0))
            valid = row < total_rows
            zero = jnp.zeros_like(pos_loss)
            pos_loss = jnp.where(valid, pos_loss, zero)
            neg_loss = jnp.where(valid, neg_loss, zero)
            positive = jnp.where(valid, positive, zero)
            negative = jnp.where(valid, negative, zero)

        # Lane-dense (block_rows, lanes) store: wide unmasked vst.
        neg_ref[...] = neg_loss

        # Per-block partial stats -> keeps the grid axis "parallel" (megacore on
        # v7x); the tiny cross-block reduction is finished in JAX.
        part_ref[:, 0:1, :] = jnp.broadcast_to(jnp.sum(pos_loss), (1, 1, 128))
        part_ref[:, 1:2, :] = jnp.broadcast_to(jnp.sum(positive), (1, 1, 128))
        part_ref[:, 2:3, :] = jnp.broadcast_to(jnp.sum(negative), (1, 1, 128))

    return kernel


def balance_cross_entropy_loss(pred, gt, mask, weight_map,
                               negative_ratio=3.0, eps=1e-6,
                               max_block_bytes=1 << 20):
    """Balanced BCE.  gt/mask may be any float dtype (bfloat16 recommended)."""
    size = pred.size

    # Lane-dense 2D view: widest lane width (multiple of 128) dividing the
    # element count -> the reshape is a free bitcast, no pad copy needed.
    lanes = 128
    for cand in (2048, 1024, 512, 256):
        if size % cand == 0:
            lanes = cand
            break
    pad = (-size) % lanes                 # 0 for any multiple-of-128 size
    rows = (size + pad) // lanes

    # ~max_block_bytes of f32 per array per pipeline buffer (v7x-safe default of
    # 1 MiB; v6e can pass 2-4 MiB).  Block rows are a multiple of 32 so f32 /
    # bf16 / int8 inputs all satisfy sublane tiling.
    target_rows = max(32, (max_block_bytes // (lanes * 4)) // 32 * 32)
    if rows <= target_rows:
        block_rows, num_blocks, ragged = rows, 1, False
    else:
        block_rows = target_rows
        num_blocks = pl.cdiv(rows, block_rows)
        ragged = (rows % block_rows) != 0

    def as_view(x):
        x = x.reshape(-1)
        if not jnp.issubdtype(x.dtype, jnp.floating):
            x = x.astype(jnp.float32)
        if pad:
            # Rare path (element count not a multiple of 128).  Zero padding is
            # neutral: mask == 0 there -> positive == negative == 0.
            x = jnp.pad(x, (0, pad))
        return x.reshape(rows, lanes)

    kernel = _make_kernel(block_rows, lanes, rows, ragged)

    neg_loss, partials = pl.pallas_call(
        kernel,
        grid=(num_blocks,),
        in_specs=[pl.BlockSpec((block_rows, lanes), lambda i: (i, 0))
                  for _ in range(4)],
        out_specs=(pl.BlockSpec((block_rows, lanes), lambda i: (i, 0)),
                   pl.BlockSpec((1, 3, 128), lambda i: (i, 0, 0))),
        out_shape=(jax.ShapeDtypeStruct((rows, lanes), jnp.float32),
                   jax.ShapeDtypeStruct((num_blocks, 3, 128), jnp.float32)),
        compiler_params=pltpu.CompilerParams(
            dimension_semantics=("parallel",),
            vmem_limit_bytes=32 * 1024 * 1024),
    )(as_view(pred), as_view(gt), as_view(mask), as_view(weight_map))

    pos_loss_sum = jnp.sum(partials[:, 0, 0])
    # Per-block counts are exact integers in f32 (block has < 2^24 elements);
    # finish the count reduction in int32 so very large inputs stay exact.
    pos_count = jnp.sum(partials[:, 1, 0].astype(jnp.int32))
    neg_count_total = jnp.sum(partials[:, 2, 0].astype(jnp.int32))

    # negative_count = min(total_negatives, int(positive_count * ratio))
    negative_count = jnp.minimum(
        neg_count_total,
        jnp.floor(pos_count.astype(jnp.float32) * negative_ratio).astype(jnp.int32))

    # TODO(synk): data-dependent-k top-k has no clean Pallas TPU equivalent; a
    # full descending sort + prefix mask is used here.  For production sizes this
    # sort dominates end-to-end time -- replace with an in-kernel histogram ->
    # threshold -> masked-sum two-pass scheme.  (Padded zeros sort last and never
    # enter the top-k sum, so correctness is unaffected.)
    neg_sorted = jnp.sort(neg_loss.reshape(-1))[::-1]
    idx = jnp.arange(neg_sorted.shape[0], dtype=jnp.int32)
    neg_loss_sum = jnp.sum(jnp.where(idx < negative_count, neg_sorted, 0.0))

    denom = (pos_count + negative_count).astype(jnp.float32) + eps
    return (pos_loss_sum + neg_loss_sum) / denom


def _reference(pred, gt, mask, weight_map, negative_ratio=3.0, eps=1e-6):
    """Pure-JAX transliteration of the PyTorch module (validation only)."""
    gt = gt.astype(jnp.float32)
    mask = mask.astype(jnp.float32)
    positive = jnp.floor(gt * mask)
    negative = jnp.floor((1.0 - gt) * mask)
    pos_count = jnp.sum(positive)
    neg_count = jnp.minimum(jnp.sum(negative),
                            jnp.floor(pos_count * negative_ratio))
    prob = jax.nn.sigmoid(pred.astype(jnp.float32))
    loss = -(gt * jnp.maximum(jnp.log(prob), -100.0)
             + (1.0 - gt) * jnp.maximum(jnp.log1p(-prob), -100.0))
    pos_loss = loss * positive * weight_map
    neg_flat = (loss * negative * weight_map).reshape(-1)
    neg_sorted = jnp.sort(neg_flat)[::-1]
    idx = jnp.arange(neg_sorted.shape[0], dtype=jnp.int32)
    neg_sum = jnp.sum(jnp.where(idx < neg_count.astype(jnp.int32), neg_sorted, 0.0))
    return (jnp.sum(pos_loss) + neg_sum) / (pos_count + neg_count + eps)


if __name__ == "__main__":
    key = jax.random.PRNGKey(0)
    k1, k2, k3, k4 = jax.random.split(key, 4)

    # Main example (NCHW).  gt/mask stored as bfloat16 (exact 0/1) to cut HBM
    # traffic; pred/weight_map stay f32.
    N, C, H, W = 2, 1, 16, 16
    pred = jax.random.normal(k1, (N, C, H, W), jnp.float32)
    gt = (jax.random.uniform(k2, (N, C, H, W)) > 0.7).astype(jnp.bfloat16)
    mask = (jax.random.uniform(k3, (N, C, H, W)) > 0.2).astype(jnp.bfloat16)
    weight_map = jax.random.uniform(k4, (N, C, H, W), dtype=jnp.float32)

    loss = balance_cross_entropy_loss(pred, gt, mask, weight_map)
    jax.block_until_ready(loss)
    ref = _reference(pred, gt, mask, weight_map)
    assert jnp.allclose(loss, ref, rtol=2e-3, atol=1e-5), (loss, ref)

    # Second config: forces a multi-block grid with a ragged last tile
    # (41 rows x 128 lanes, 32-row blocks) to exercise the tiled/masked path.
    shape2 = (2, 1, 41, 64)   # 5248 elements = 41 * 128
    p2 = jax.random.normal(k1, shape2, jnp.float32)
    g2 = (jax.random.uniform(k2, shape2) > 0.7).astype(jnp.bfloat16)
    m2 = (jax.random.uniform(k3, shape2) > 0.2).astype(jnp.bfloat16)
    w2 = jax.random.uniform(k4, shape2, dtype=jnp.float32)
    loss2 = balance_cross_entropy_loss(p2, g2, m2, w2,
                                       max_block_bytes=32 * 128 * 4)
    jax.block_until_ready(loss2)
    ref2 = _reference(p2, g2, m2, w2)
    assert jnp.allclose(loss2, ref2, rtol=2e-3, atol=1e-5), (loss2, ref2)

    print("KERNEL_OK")
</pallas_src>

<mosaic_0001>
module attributes {stable_mosaic.version = 11 : i64} {
  func.func @kernel(%arg0: i32, %arg1: memref<1x512xf32, #tpu.memory_space<vmem>>, %arg2: memref<1x512xbf16, #tpu.memory_space<vmem>>, %arg3: memref<1x512xbf16, #tpu.memory_space<vmem>>, %arg4: memref<1x512xf32, #tpu.memory_space<vmem>>, %arg5: memref<1x512xf32, #tpu.memory_space<vmem>>, %arg6: memref<1x3x128xf32, #tpu.memory_space<vmem>>) attributes {dimension_semantics = [#tpu.dimension_semantics<parallel>], iteration_bounds = array<i64: 1>, scalar_prefetch = 0 : i64, scratch_operands = 0 : i64, tpu.core_type = #tpu.core_type<tc>, window_params = [{transform_indices = @transform_0, window_bounds = array<i64: 1, 512>}, {transform_indices = @transform_1, window_bounds = array<i64: 1, 512>}, {transform_indices = @transform_2, window_bounds = array<i64: 1, 512>}, {transform_indices = @transform_3, window_bounds = array<i64: 1, 512>}, {transform_indices = @transform_4, window_bounds = array<i64: 1, 512>}, {transform_indices = @transform_5, window_bounds = array<i64: 1, 3, 128>}]} {
    %c0 = arith.constant 0 : index
    %c0_0 = arith.constant 0 : index
    %0 = vector.load %arg1[%c0, %c0_0] : memref<1x512xf32, #tpu.memory_space<vmem>>, vector<1x512xf32>
    %c0_1 = arith.constant 0 : index
    %c0_2 = arith.constant 0 : index
    %1 = vector.load %arg2[%c0_1, %c0_2] : memref<1x512xbf16, #tpu.memory_space<vmem>>, vector<1x512xbf16>
    %2 = arith.extf %1 : vector<1x512xbf16> to vector<1x512xf32>
    %c0_3 = arith.constant 0 : index
    %c0_4 = arith.constant 0 : index
    %3 = vector.load %arg3[%c0_3, %c0_4] : memref<1x512xbf16, #tpu.memory_space<vmem>>, vector<1x512xbf16>
    %4 = arith.extf %3 : vector<1x512xbf16> to vector<1x512xf32>
    %c0_5 = arith.constant 0 : index
    %c0_6 = arith.constant 0 : index
    %5 = vector.load %arg4[%c0_5, %c0_6] : memref<1x512xf32, #tpu.memory_space<vmem>>, vector<1x512xf32>
    %6 = arith.mulf %2, %4 : vector<1x512xf32>
    %7 = math.floor %6 : vector<1x512xf32>
    %cst = arith.constant 1.000000e+00 : f32
    %8 = vector.broadcast %cst : f32 to vector<1x512xf32>
    %9 = arith.subf %8, %2 : vector<1x512xf32>
    %10 = arith.mulf %9, %4 : vector<1x512xf32>
    %11 = math.floor %10 : vector<1x512xf32>
    %cst_7 = arith.constant 0.000000e+00 : f32
    %12 = vector.broadcast %cst_7 : f32 to vector<1x512xf32>
    %13 = arith.maximumf %0, %12 : vector<1x512xf32>
    %14 = arith.mulf %0, %2 : vector<1x512xf32>
    %15 = arith.subf %13, %14 : vector<1x512xf32>
    %16 = math.absf %0 : vector<1x512xf32>
    %cst_8 = arith.constant 0.000000e+00 : f32
    %17 = vector.broadcast %cst_8 : f32 to vector<1x512xf32>
    %18 = arith.subf %17, %16 : vector<1x512xf32>
    %19 = math.exp %18 : vector<1x512xf32>
    %cst_9 = arith.constant 1.000000e+00 : f32
    %20 = vector.broadcast %cst_9 : f32 to vector<1x512xf32>
    %21 = arith.addf %20, %19 : vector<1x512xf32>
    %22 = math.log %21 : vector<1x512xf32>
    %23 = arith.addf %15, %22 : vector<1x512xf32>
    %24 = arith.mulf %23, %7 : vector<1x512xf32>
    %25 = arith.mulf %24, %5 : vector<1x512xf32>
    %26 = arith.mulf %23, %11 : vector<1x512xf32>
    %27 = arith.mulf %26, %5 : vector<1x512xf32>
    %c0_10 = arith.constant 0 : index
    %c0_11 = arith.constant 0 : index
    %28 = vector.load %arg5[%c0_10, %c0_11] : memref<1x512xf32, #tpu.memory_space<vmem>>, vector<1x512xf32>
    tpu.vector_store %arg5[%c0_10, %c0_11], %27 {strides = array<i32>} : memref<1x512xf32, #tpu.memory_space<vmem>>, vector<1x512xf32>,
    %29 = vector.shape_cast %25 : vector<1x512xf32> to vector<1x1x512xf32>
    %cst_12 = arith.constant dense<0.000000e+00> : vector<1xf32>
    %30 = vector.multi_reduction <add>, %29, %cst_12 [1, 2] : vector<1x1x512xf32> to vector<1xf32>
    %31 = vector.shape_cast %30 : vector<1xf32> to vector<1x1x1xf32>
    %32 = vector.extract %31[0, 0, 0] : f32 from vector<1x1x1xf32>
    %33 = vector.broadcast %32 : f32 to vector<1x1x128xf32>
    %c0_13 = arith.constant 0 : index
    %c0_14 = arith.constant 0 : index
    %c0_15 = arith.constant 0 : index
    %34 = vector.load %arg6[%c0_13, %c0_14, %c0_15] : memref<1x3x128xf32, #tpu.memory_space<vmem>>, vector<1x1x128xf32>
    tpu.vector_store %arg6[%c0_13, %c0_14, %c0_15], %33 {strides = array<i32>} : memref<1x3x128xf32, #tpu.memory_space<vmem>>, vector<1x1x128xf32>,
    %35 = vector.shape_cast %7 : vector<1x512xf32> to vector<1x1x512xf32>
    %cst_16 = arith.constant dense<0.000000e+00> : vector<1xf32>
    %36 = vector.multi_reduction <add>, %35, %cst_16 [1, 2] : vector<1x1x512xf32> to vector<1xf32>
    %37 = vector.shape_cast %36 : vector<1xf32> to vector<1x1x1xf32>
    %38 = vector.extract %37[0, 0, 0] : f32 from vector<1x1x1xf32>
    %39 = vector.broadcast %38 : f32 to vector<1x1x128xf32>
    %c0_17 = arith.constant 0 : index
    %c1 = arith.constant 1 : index
    %c0_18 = arith.constant 0 : index
    %40 = vector.load %arg6[%c0_17, %c1, %c0_18] : memref<1x3x128xf32, #tpu.memory_space<vmem>>, vector<1x1x128xf32>
    tpu.vector_store %arg6[%c0_17, %c1, %c0_18], %39 {strides = array<i32>} : memref<1x3x128xf32, #tpu.memory_space<vmem>>, vector<1x1x128xf32>,
    %41 = vector.shape_cast %11 : vector<1x512xf32> to vector<1x1x512xf32>
    %cst_19 = arith.constant dense<0.000000e+00> : vector<1xf32>
    %42 = vector.multi_reduction <add>, %41, %cst_19 [1, 2] : vector<1x1x512xf32> to vector<1xf32>
    %43 = vector.shape_cast %42 : vector<1xf32> to vector<1x1x1xf32>
    %44 = vector.extract %43[0, 0, 0] : f32 from vector<1x1x1xf32>
    %45 = vector.broadcast %44 : f32 to vector<1x1x128xf32>
    %c0_20 = arith.constant 0 : index
    %c2 = arith.constant 2 : index
    %c0_21 = arith.constant 0 : index
    %46 = vector.load %arg6[%c0_20, %c2, %c0_21] : memref<1x3x128xf32, #tpu.memory_space<vmem>>, vector<1x1x128xf32>
    tpu.vector_store %arg6[%c0_20, %c2, %c0_21], %45 {strides = array<i32>} : memref<1x3x128xf32, #tpu.memory_space<vmem>>, vector<1x1x128xf32>,
    return
  }
  func.func @transform_0(%arg0: i32) -> (i32, i32) {
    %c0_i32 = arith.constant 0 : i32
    %c0_i32_0 = arith.constant 0 : i32
    return %arg0, %c0_i32 : i32, i32
  }
  func.func @transform_1(%arg0: i32) -> (i32, i32) {
    %c0_i32 = arith.constant 0 : i32
    %c0_i32_0 = arith.constant 0 : i32
    return %arg0, %c0_i32 : i32, i32
  }
  func.func @transform_2(%arg0: i32) -> (i32, i32) {
    %c0_i32 = arith.constant 0 : i32
    %c0_i32_0 = arith.constant 0 : i32
    return %arg0, %c0_i32 : i32, i32
  }
  func.func @transform_3(%arg0: i32) -> (i32, i32) {
    %c0_i32 = arith.constant 0 : i32
    %c0_i32_0 = arith.constant 0 : i32
    return %arg0, %c0_i32 : i32, i32
  }
  func.func @transform_4(%arg0: i32) -> (i32, i32) {
    %c0_i32 = arith.constant 0 : i32
    %c0_i32_0 = arith.constant 0 : i32
    return %arg0, %c0_i32 : i32, i32
  }
  func.func @transform_5(%arg0: i32) -> (i32, i32, i32) {
    %c0_i32 = arith.constant 0 : i32
    %c0_i32_0 = arith.constant 0 : i32
    %c0_i32_1 = arith.constant 0 : i32
    return %arg0, %c0_i32, %c0_i32_0 : i32, i32, i32
  }
}

</mosaic_0001>

<llo_original>
// kernel: tpu_custom_call.1
$region0: #{tpu_custom_call.1}
  #allocation0 [shape = 'u32[]', space=smem, size = 0x4, offset = 0x4, fixed_abs, tag = 'smem constant byte address 0x4 - core index']
  #allocation1 [shape = 'u32[72,128]{1,0:T(1,128)}', space=vmem, size = 0x9000, scoped, tag = 'internal scratch']
  %s0 = inlined_call_operand.hbm [shape: f32[1,512], index: 0, kind: input, shape index: {}]
  %s1 = inlined_call_operand.hbm [shape: bf16[1,512], index: 1, kind: input, shape index: {}]
  %s2 = inlined_call_operand.hbm [shape: bf16[1,512], index: 2, kind: input, shape index: {}]
  %s3 = inlined_call_operand.hbm [shape: f32[1,512], index: 3, kind: input, shape index: {}]
  %s4 = inlined_call_operand.hbm [shape: f32[1,512], index: 4, kind: output, shape index: {0}]
  %s5 = inlined_call_operand.vmem [shape: f32[1,3,128], index: 5, kind: output, shape index: {1}]
  %6 = xla_tuple %s4, %s5
  %s7 = sld [smem:[#allocation0]]
  $region50: #{tpu_custom_call.1} parent=0
    _
  %s9 = ssub.s32 1, %s7
  %s10 = scalar_select 0, %s9, %s7
  $region1: #{tpu_custom_call.1} parent=0
    #allocation2 [shape = 'u8[2048]{0}', space=vmem, size = 0x800, scoped, tag = 'input window, operand 0, single buffered']
    #allocation3 [shape = 's32[1]{0}', space=sflag, size = 0x4, scoped, tag = 'scoped memory for tpu_custom_call.1']
    #allocation4 [shape = 's32[1]{0}', space=sflag, size = 0x4, scoped, tag = 'scoped memory for tpu_custom_call.1']
    #allocation5 [shape = 'u8[2048]{0}', space=vmem, size = 0x800, scoped, tag = 'input window, operand 1, single buffered']
    #allocation6 [shape = 's32[1]{0}', space=sflag, size = 0x4, scoped, tag = 'scoped memory for tpu_custom_call.1']
    #allocation7 [shape = 'u8[2048]{0}', space=vmem, size = 0x800, scoped, tag = 'input window, operand 2, single buffered']
    #allocation8 [shape = 'u8[2048]{0}', space=vmem, size = 0x800, scoped, tag = 'input window, operand 3, single buffered']
    #allocation9 [shape = 's32[1]{0}', space=sflag, size = 0x4, scoped, tag = 'scoped memory for tpu_custom_call.1']
    #allocation10 [shape = 'u8[2048]{0}', space=vmem, size = 0x800, scoped, tag = 'output window, operand 0, single buffered']
    %11 = vsyncpa [#allocation3], 0
    %12 = vsyncpa [#allocation6], 0
    %13 = vsyncpa [#allocation9], 0
    %14 = vsyncpa [#allocation4], 0
    // Predicated region
    $region2: #{tpu_custom_call.1} parent=1 // pred_check
      _
    $region3: #{tpu_custom_call.1} parent=1 // pred_check_branch
      %16 = sbr.rel (0) target = $region5
    $region4: #{tpu_custom_call.1} parent=1 // pred_region
      %18 = vsyncadd [#allocation3], 0
      %s20 = sshll.u32 %s0, 4
      %s21 = int_to_ptr.hbm [resolvable:$true] %s20
      %s22 = sshll.u32 [#allocation2], 4
      %s23 = int_to_ptr.vmem [resolvable:$true] %s22
      %25 = dma.hbm_to_vmem [thread:$0]  %s21, 64, %s23, [#allocation3]
    $region5: #{tpu_custom_call.1} parent=1 // pred_fallthru
      _
    // Predicated region
    $region6: #{tpu_custom_call.1} parent=1 // pred_check
      _
    $region7: #{tpu_custom_call.1} parent=1 // pred_check_branch
      %27 = sbr.rel (0) target = $region9
    $region8: #{tpu_custom_call.1} parent=1 // pred_region
      %29 = vsyncadd [#allocation6], 0
      %s31 = sshll.u32 %s1, 4
      %s32 = int_to_ptr.hbm [resolvable:$true] %s31
      %s33 = sshll.u32 [#allocation5], 4
      %s34 = int_to_ptr.vmem [resolvable:$true] %s33
      %36 = dma.hbm_to_vmem [thread:$0]  %s32, 64, %s34, [#allocation6]
    $region9: #{tpu_custom_call.1} parent=1 // pred_fallthru
      _
    // Predicated region
    $region10: #{tpu_custom_call.1} parent=1 // pred_check
      _
    $region11: #{tpu_custom_call.1} parent=1 // pred_check_branch
      %38 = sbr.rel (0) target = $region13
    $region12: #{tpu_custom_call.1} parent=1 // pred_region
      %40 = vsyncadd [#allocation6], 0
      %s42 = sshll.u32 %s2, 4
      %s43 = int_to_ptr.hbm [resolvable:$true] %s42
      %s44 = sshll.u32 [#allocation7], 4
      %s45 = int_to_ptr.vmem [resolvable:$true] %s44
      %47 = dma.hbm_to_vmem [thread:$0]  %s43, 64, %s45, [#allocation6]
    $region13: #{tpu_custom_call.1} parent=1 // pred_fallthru
      _
    // Predicated region
    $region14: #{tpu_custom_call.1} parent=1 // pred_check
      _
    $region15: #{tpu_custom_call.1} parent=1 // pred_check_branch
      %49 = sbr.rel (0) target = $region17
    $region16: #{tpu_custom_call.1} parent=1 // pred_region
      %51 = vsyncadd [#allocation9], 0
      %s53 = sshll.u32 %s3, 4
      %s54 = int_to_ptr.hbm [resolvable:$true] %s53
      %s55 = sshll.u32 [#allocation8], 4
      %s56 = int_to_ptr.vmem [resolvable:$true] %s55
      %58 = dma.hbm_to_vmem [thread:$0]  %s54, 64, %s56, [#allocation9]
    $region17: #{tpu_custom_call.1} parent=1 // pred_fallthru
      _
    // Predicated region
    $region18: #{tpu_custom_call.1} parent=1 // pred_check
      _
    $region19: #{tpu_custom_call.1} parent=1 // pred_check_branch
      %60 = sbr.rel (0) target = $region21
    $region20: #{tpu_custom_call.1} parent=1 // pred_region
      %62 = dma.done [#allocation3], 64
    $region21: #{tpu_custom_call.1} parent=1 // pred_fallthru
      _
    // Predicated region
    $region22: #{tpu_custom_call.1} parent=1 // pred_check
      _
    $region23: #{tpu_custom_call.1} parent=1 // pred_check_branch
      %64 = sbr.rel (0) target = $region25
    $region24: #{tpu_custom_call.1} parent=1 // pred_region
      %66 = dma.done [#allocation6], 64
    $region25: #{tpu_custom_call.1} parent=1 // pred_fallthru
      _
    // Predicated region
    $region26: #{tpu_custom_call.1} parent=1 // pred_check
      _
    $region27: #{tpu_custom_call.1} parent=1 // pred_check_branch
      %68 = sbr.rel (0) target = $region29
    $region28: #{tpu_custom_call.1} parent=1 // pred_region
      %70 = dma.done [#allocation6], 64
    $region29: #{tpu_custom_call.1} parent=1 // pred_fallthru
      _
    // Predicated region
    $region30: #{tpu_custom_call.1} parent=1 // pred_check
      _
    $region31: #{tpu_custom_call.1} parent=1 // pred_check_branch
      %72 = sbr.rel (0) target = $region33
    $region32: #{tpu_custom_call.1} parent=1 // pred_region
      %74 = dma.done [#allocation9], 64
    $region33: #{tpu_custom_call.1} parent=1 // pred_fallthru
      _
    %v75 = vld [vmem:[#allocation2] sm:$0xf]
    %v76 = vld [vmem:[#allocation5] sm:$0xf]
    %v77 = vunpack.c.l.bf16 %v76
    %v78 = vld [vmem:[#allocation7] sm:$0xf]
    %v79 = vunpack.c.l.bf16 %v78
    %v80 = vld [vmem:[#allocation8] sm:$0xf]
    %v81 = vmul.f32 %v77, %v79
    %v82 = vfloor.f32 %v81
    %v83 = vsub.f32 1.0, %v77
    %v84 = vmul.f32 %v83, %v79
    %v85 = vfloor.f32 %v84
    %v86 = vmax.f32 %v75, 0.0
    %v88 = vrot.slane %v77, 1
    %v89 = vrot.slane %v77, 2
    %v90 = vrot.slane %v77, 3
    %vm91 = vcmask 1040384
    %v92 = vsel %vm91, %v77, %v88
    %vm93 = vcmask 1042434
    %v94 = vsel %vm93, %v89, %v90
    %vm95 = vcmask 1041408
    %v96 = vsel %vm95, %v92, %v94
    %v98 = vmul.f32 %v75, %v96
    %v99 = vsub.f32 %v86, %v98
    %v100 = vand.u32 2147483647, %v75
    %v101 = vsub.f32 0.0, %v100
    %v102 = vmul.f32 %v101, 1.442695
    %v103 = vpow.pop %v102
    %v104 = vadd.f32 %v103, 1.0
    %v105 = vlog2.pop %v104
    %v106 = vmul.f32 %v105, 0.6931472
    %v107 = vadd.f32 %v99, %v106
    %v109 = vrot.slane %v82, 1
    %v110 = vrot.slane %v82, 2
    %v111 = vrot.slane %v82, 3
    %v112 = vsel %vm91, %v82, %v109
    %v113 = vsel %vm93, %v110, %v111
    %v114 = vsel %vm95, %v112, %v113
    %v116 = vmul.f32 %v107, %v114
    %v117 = vmul.f32 %v116, %v80
    %v119 = vrot.slane %v85, 1
    %v120 = vrot.slane %v85, 2
    %v121 = vrot.slane %v85, 3
    %v122 = vsel %vm91, %v85, %v119
    %v123 = vsel %vm93, %v120, %v121
    %v124 = vsel %vm95, %v122, %v123
    %v126 = vmul.f32 %v107, %v124
    %v127 = vmul.f32 %v126, %v80
    %v128 = vlaneseq
    %vm129 = vcmp.ge.s32.totalorder %v128, 0
    %vm130 = vcmp.lt.s32.totalorder %v128, 512
    %vm131 = vmand %vm129, %vm130
    %132 = vst.msk [vmem:[#allocation10] sm:$0xf] %vm131, %v127
    %v134 = vperm.slane %v117, 0
    %v135 = vperm.slane %v117, 1
    %v136 = vperm.slane %v117, 2
    %v137 = vperm.slane %v117, 3
    %v142 = vsel %vm91, %v134, 0.0
    %v143 = vsel %vm91, %v135, 0.0
    %v144 = vadd.f32 %v142, %v143
    %v145 = vsel %vm91, %v136, 0.0
    %v146 = vadd.f32 %v144, %v145
    %v147 = vsel %vm91, %v137, 0.0
    %v148 = vadd.f32 %v146, %v147
    %149 = vadd.xlane.f32.xlu0 %v148
    %v150 = vpop.xlane.xlu0 %149
    %v151 = vrot.slane %v150, 4
    %v152 = vadd.f32 %v150, %v151
    %v153 = vrot.slane %v152, 2
    %v154 = vadd.f32 %v152, %v153
    %v155 = vrot.slane %v154, 1
    %v156 = vadd.f32 %v154, %v155
    %s157 = vtos %v156
    %v158 = vstv %s157
    %159 = vst [vmem:[%s5] sm:$0x1] %v158
    %v160 = vperm.slane %v82, 0
    %v161 = vperm.slane %v82, 2
    %v162 = vperm.slane %v82, 4
    %v163 = vperm.slane %v82, 6
    %v168 = vsel %vm91, %v160, 0.0
    %v169 = vsel %vm91, %v161, 0.0
    %v170 = vadd.f32 %v168, %v169
    %v171 = vsel %vm91, %v162, 0.0
    %v172 = vadd.f32 %v170, %v171
    %v173 = vsel %vm91, %v163, 0.0
    %v174 = vadd.f32 %v172, %v173
    %175 = vadd.xlane.f32.xlu0 %v174
    %v176 = vpop.xlane.xlu0 %175
    %v177 = vrot.slane %v176, 4
    %v178 = vadd.f32 %v176, %v177
    %v179 = vrot.slane %v178, 2
    %v180 = vadd.f32 %v178, %v179
    %v181 = vrot.slane %v180, 1
    %v182 = vadd.f32 %v180, %v181
    %s183 = vtos %v182
    %v184 = vstv %s183
    %185 = vst [vmem:[%s5 + $0x1] sm:$0x1] %v184
    %v186 = vperm.slane %v85, 0
    %v187 = vperm.slane %v85, 2
    %v188 = vperm.slane %v85, 4
    %v189 = vperm.slane %v85, 6
    %v194 = vsel %vm91, %v186, 0.0
    %v195 = vsel %vm91, %v187, 0.0
    %v196 = vadd.f32 %v194, %v195
    %v197 = vsel %vm91, %v188, 0.0
    %v198 = vadd.f32 %v196, %v197
    %v199 = vsel %vm91, %v189, 0.0
    %v200 = vadd.f32 %v198, %v199
    %201 = vadd.xlane.f32.xlu0 %v200
    %v202 = vpop.xlane.xlu0 %201
    %v203 = vrot.slane %v202, 4
    %v204 = vadd.f32 %v202, %v203
    %v205 = vrot.slane %v204, 2
    %v206 = vadd.f32 %v204, %v205
    %v207 = vrot.slane %v206, 1
    %v208 = vadd.f32 %v206, %v207
    %s209 = vtos %v208
    %v210 = vstv %s209
    %211 = vst [vmem:[%s5 + $0x2] sm:$0x1] %v210
    // Predicated region
    $region34: #{tpu_custom_call.1} parent=1 // pred_check
      _
    $region35: #{tpu_custom_call.1} parent=1 // pred_check_branch
      %213 = sbr.rel (0) target = $region37
    $region36: #{tpu_custom_call.1} parent=1 // pred_region
      %215 = vsyncadd [#allocation4], 0
      %s217 = sshll.u32 [#allocation10], 4
      %s218 = int_to_ptr.vmem [resolvable:$true] %s217
      %s219 = sshll.u32 %s4, 4
      %s220 = int_to_ptr.hbm [resolvable:$true] %s219
      %222 = dma.vmem_to_hbm [thread:$0]  %s218, 64, %s220, [#allocation4]
    $region37: #{tpu_custom_call.1} parent=1 // pred_fallthru
      _
    // Predicated region
    $region38: #{tpu_custom_call.1} parent=1 // pred_check
      _
    $region39: #{tpu_custom_call.1} parent=1 // pred_check_branch
      %224 = sbr.rel (0) target = $region41
    $region40: #{tpu_custom_call.1} parent=1 // pred_region
      _
    $region41: #{tpu_custom_call.1} parent=1 // pred_fallthru
      _
    // Predicated region
    $region42: #{tpu_custom_call.1} parent=1 // pred_check
      _
    $region43: #{tpu_custom_call.1} parent=1 // pred_check_branch
      %226 = sbr.rel (0) target = $region45
    $region44: #{tpu_custom_call.1} parent=1 // pred_region
      %228 = dma.done [#allocation4], 64
    $region45: #{tpu_custom_call.1} parent=1 // pred_fallthru
      _
    // Predicated region
    $region46: #{tpu_custom_call.1} parent=1 // pred_check
      _
    $region47: #{tpu_custom_call.1} parent=1 // pred_check_branch
      %230 = sbr.rel (0) target = $region49
    $region48: #{tpu_custom_call.1} parent=1 // pred_region
      _
    $region49: #{tpu_custom_call.1} parent=1 // pred_fallthru
      _
    %231 = vsyncpa [#allocation3], 1
    %232 = vsyncpa [#allocation6], 1
    %233 = vsyncpa [#allocation9], 1
    %234 = vsyncpa [#allocation4], 1

</llo_original>
